<compile_context>
chip_gen: v7x
topology: tpu7x:2x2x1
jax: 0.10.0
libtpu: 0.0.40
codegen_flags: <defaults>
</compile_context>

<pallas_src>
import itertools
import math
from functools import partial

import jax
import jax.numpy as jnp
from jax.experimental import pallas as pl
from jax.experimental.pallas import tpu as pltpu

ROW_TILE = 256                    # fills 256-wide MXU on v6e/v7x; small enough for v5e
VMEM_LIMIT = 48 * 1024 * 1024     # explicit scoped-VMEM budget; below physical on all gens


# ------------------------------------------------------------------ helpers --

def _round_up(x, m):
    return (x + m - 1) // m * m


def _pad2(a, rows, cols):
    return jnp.pad(a, ((0, rows - a.shape[0]), (0, cols - a.shape[1])))


def _gelu_exact(x):
    # torch.nn.GELU() default = exact erf formulation.
    return 0.5 * x * (1.0 + jax.lax.erf(x * 0.7071067811865476))


def _gelu_tanh(x):
    return jax.nn.gelu(x, approximate=True)


# ------------------------------------------------------------------ kernels --
# Grouped kernels: x is one row tile (tn, Kin_pad) of the concatenated-per-type rows;
# weights are stacked (T, Kin_pad, Out_pad) and the per-tile type id (scalar-prefetched
# into SMEM) selects which weight block is DMA'd.  Zero padding of weights / biases /
# inputs is mathematically inert, so the top-left (fan_in, fan_out) block reproduces
# torch.nn.Linear exactly.  `tid_ref` (the scalar-prefetch ref) is unused in the body.

def _make_mlp2_kernel(act):
    def kernel(tid_ref, x_ref, w1_ref, b1_ref, w2_ref, b2_ref, o_ref):
        del tid_ref
        wdt = w1_ref.dtype
        h = act(jnp.dot(x_ref[...].astype(wdt), w1_ref[0],
                        preferred_element_type=jnp.float32) + b1_ref[0])
        o_ref[...] = (jnp.dot(h.astype(wdt), w2_ref[0],
                              preferred_element_type=jnp.float32)
                      + b2_ref[0]).astype(o_ref.dtype)
    return kernel


def _make_mlp2_dec_kernel(act):
    """Fused Linear -> GELU -> Linear (hidden) -> Linear (decoder); two outputs so the
    hidden state never round-trips through HBM before its decoder."""
    def kernel(tid_ref, x_ref, w1_ref, b1_ref, w2_ref, b2_ref, wd_ref, bd_ref,
               h_ref, d_ref):
        del tid_ref
        wdt = w1_ref.dtype
        g = act(jnp.dot(x_ref[...].astype(wdt), w1_ref[0],
                        preferred_element_type=jnp.float32) + b1_ref[0])
        h = jnp.dot(g.astype(wdt), w2_ref[0],
                    preferred_element_type=jnp.float32) + b2_ref[0]
        h_ref[...] = h.astype(h_ref.dtype)
        d_ref[...] = (jnp.dot(h.astype(wdt), wd_ref[0],
                              preferred_element_type=jnp.float32)
                      + bd_ref[0]).astype(d_ref.dtype)
    return kernel


def _make_chain_kernel(num_layers, act):
    """Whole MessageNet in one kernel: all layer weights VMEM-resident, activations chain
    in-register.  Unrolled at trace time."""
    def kernel(*refs):
        x_ref, o_ref = refs[0], refs[-1]
        wdt = refs[1].dtype
        h = x_ref[...]
        for i in range(num_layers):
            w = refs[1 + 2 * i][...]
            b = refs[2 + 2 * i][...]
            h = jnp.dot(h.astype(wdt), w, preferred_element_type=jnp.float32) + b
            if i < num_layers - 1:
                h = act(h)
        o_ref[...] = h.astype(o_ref.dtype)
    return kernel


# ----------------------------------------------------------------- wrappers --

def _call_mlp2(x, tile_type, w1, b1, w2, b2, *, tn, act):
    n_pad, kin = x.shape
    _, _, hpad = w1.shape
    row_in = pl.BlockSpec((tn, kin), lambda r, t: (r, 0))
    row_out = pl.BlockSpec((tn, hpad), lambda r, t: (r, 0))

    def wspec(s1, s2):
        return pl.BlockSpec((1, s1, s2), lambda r, t: (t[r], 0, 0))

    cost = pl.CostEstimate(
        flops=int(2 * n_pad * (kin * hpad + hpad * hpad)),
        transcendentals=int(n_pad * hpad),
        bytes_accessed=int(x.size * x.dtype.itemsize
                           + (w1.size + w2.size) * w1.dtype.itemsize
                           + (b1.size + b2.size) * 4 + n_pad * hpad * 4))
    grid_spec = pltpu.PrefetchScalarGridSpec(
        num_scalar_prefetch=1,
        grid=(n_pad // tn,),
        in_specs=[row_in, wspec(kin, hpad), wspec(1, hpad),
                  wspec(hpad, hpad), wspec(1, hpad)],
        out_specs=row_out)
    return pl.pallas_call(
        _make_mlp2_kernel(act),
        out_shape=jax.ShapeDtypeStruct((n_pad, hpad), jnp.float32),
        grid_spec=grid_spec,
        compiler_params=pltpu.CompilerParams(
            dimension_semantics=("parallel",), vmem_limit_bytes=VMEM_LIMIT),
        cost_estimate=cost,
    )(tile_type, x, w1, b1, w2, b2)


def _call_mlp2_dec(x, tile_type, w1, b1, w2, b2, wd, bd, *, tn, act):
    n_pad, kin = x.shape
    _, _, hpad = w1.shape
    outpad = wd.shape[2]
    row_in = pl.BlockSpec((tn, kin), lambda r, t: (r, 0))
    row_h = pl.BlockSpec((tn, hpad), lambda r, t: (r, 0))
    row_d = pl.BlockSpec((tn, outpad), lambda r, t: (r, 0))

    def wspec(s1, s2):
        return pl.BlockSpec((1, s1, s2), lambda r, t: (t[r], 0, 0))

    cost = pl.CostEstimate(
        flops=int(2 * n_pad * (kin * hpad + hpad * hpad + hpad * outpad)),
        transcendentals=int(n_pad * hpad),
        bytes_accessed=int(x.size * x.dtype.itemsize
                           + (w1.size + w2.size + wd.size) * w1.dtype.itemsize
                           + (b1.size + b2.size + bd.size) * 4
                           + n_pad * (hpad + outpad) * 4))
    grid_spec = pltpu.PrefetchScalarGridSpec(
        num_scalar_prefetch=1,
        grid=(n_pad // tn,),
        in_specs=[row_in, wspec(kin, hpad), wspec(1, hpad),
                  wspec(hpad, hpad), wspec(1, hpad),
                  wspec(hpad, outpad), wspec(1, outpad)],
        out_specs=(row_h, row_d))
    return pl.pallas_call(
        _make_mlp2_dec_kernel(act),
        out_shape=(jax.ShapeDtypeStruct((n_pad, hpad), jnp.float32),
                   jax.ShapeDtypeStruct((n_pad, outpad), jnp.float32)),
        grid_spec=grid_spec,
        compiler_params=pltpu.CompilerParams(
            dimension_semantics=("parallel",), vmem_limit_bytes=VMEM_LIMIT),
        cost_estimate=cost,
    )(tile_type, x, w1, b1, w2, b2, wd, bd)


def _call_chain(x, ws, bs, *, tn, act):
    n_pad, k0 = x.shape
    hpad = ws[-1].shape[1]
    num_layers = len(ws)
    in_specs = [pl.BlockSpec((tn, k0), lambda r: (r, 0))]
    args = [x]
    for w, b in zip(ws, bs):
        ki, ko = w.shape
        in_specs.append(pl.BlockSpec((ki, ko), lambda r: (0, 0)))
        in_specs.append(pl.BlockSpec((1, ko), lambda r: (0, 0)))
        args += [w, b]
    cost = pl.CostEstimate(
        flops=int(2 * n_pad * sum(w.shape[0] * w.shape[1] for w in ws)),
        transcendentals=int((num_layers - 1) * n_pad * hpad),
        bytes_accessed=int(sum(a.size * a.dtype.itemsize for a in args)
                           + n_pad * hpad * 4))
    return pl.pallas_call(
        _make_chain_kernel(num_layers, act),
        out_shape=jax.ShapeDtypeStruct((n_pad, hpad), jnp.float32),
        grid=(n_pad // tn,),
        in_specs=in_specs,
        out_specs=pl.BlockSpec((tn, hpad), lambda r: (r, 0)),
        compiler_params=pltpu.CompilerParams(
            dimension_semantics=("parallel",), vmem_limit_bytes=VMEM_LIMIT),
        cost_estimate=cost,
    )(*args)


# ----------------------------------------------------------- parameter init --

def _init_linear(key, fan_in, fan_out):
    """torch.nn.Linear-style init: U(-1/sqrt(fan_in), 1/sqrt(fan_in)); weight returned
    already transposed to (fan_in, fan_out) so kernels compute x @ W + b."""
    kw, kb = jax.random.split(key)
    bound = 1.0 / math.sqrt(fan_in)
    w = jax.random.uniform(kw, (fan_in, fan_out), jnp.float32, -bound, bound)
    b = jax.random.uniform(kb, (1, fan_out), jnp.float32, -bound, bound)
    return w, b


class EncoderDecoderFactoryPallas:
    """JAX/Pallas equivalent of the PyTorch EncoderDecoderFactory.

    Batched hot-path methods (encode_nodes / update_and_decode_nodes /
    encode_and_decode_edges / message_net) each run ONE pallas_call using a grouped
    (ragged) row layout with scalar-prefetched per-tile type ids.  ModuleDict-style
    per-type callables (node_encoders[sym], ...) are kept for API parity and run in
    plain jnp/XLA (a handful of rows is launch-overhead dominated in Pallas).
    """

    def __init__(self, atom_types, edge_types, hidden_dim, center_sizes, edge_sizes,
                 message_layers=3, message_dropout=0.1, seed=0,
                 use_bf16=False, gelu_approx=False):
        self.atom_types = list(atom_types)
        self.edge_types = list(edge_types)
        self.hidden_dim = hidden_dim
        self.center_sizes = dict(center_sizes)
        self.edge_sizes = dict(edge_sizes)
        self.dot_dtype = jnp.bfloat16 if use_bf16 else jnp.float32
        self._act = _gelu_tanh if gelu_approx else _gelu_exact

        H = hidden_dim
        # Per-stage padded dims (each 128-multiple, independent of the others).
        self.h_pad = _round_up(H, 128)
        self.ne_kin = _round_up(max(center_sizes[s] for s in self.atom_types), 128)
        self.nu_kin = _round_up(2 * H, 128)
        self.cd_out = _round_up(max(center_sizes[s] for s in self.atom_types), 128)
        self.ee_kin = _round_up(max(edge_sizes[k] + 1 for k in self.edge_types), 128)
        self.ed_out = _round_up(max(edge_sizes[k] for k in self.edge_types), 128)
        self.msg_kin = _round_up(3 * H, 128)

        key = jax.random.PRNGKey(seed)

        def nk():
            nonlocal key
            key, sub = jax.random.split(key)
            return sub

        # ---- raw (unpadded) per-module parameters: exact PyTorch semantics ----
        self.raw_node_enc, self.raw_node_upd, self.raw_center_dec = {}, {}, {}
        for sym in self.atom_types:
            cs = center_sizes[sym]
            self.raw_node_enc[sym] = _init_linear(nk(), cs, H) + _init_linear(nk(), H, H)
            self.raw_node_upd[sym] = _init_linear(nk(), 2 * H, H) + _init_linear(nk(), H, H)
            self.raw_center_dec[sym] = _init_linear(nk(), H, cs)

        self.raw_edge_enc, self.raw_edge_dec = {}, {}
        for ek in self.edge_types:
            es = edge_sizes[ek]
            self.raw_edge_enc[ek] = _init_linear(nk(), es + 1, H) + _init_linear(nk(), H, H)
            self.raw_edge_dec[ek] = _init_linear(nk(), H, es)

        # TODO(synk): MessageNet's definition is not in the reference snippet; modeled as a
        # stack of Linear(+GELU) layers (3H -> H -> ... -> H), no activation on the final
        # layer, dropout disabled (eval-mode identity).
        in_dims = [3 * H] + [H] * (message_layers - 1)
        self.raw_msg = [_init_linear(nk(), d, H) for d in in_dims]

        # ---- stacked, zero-padded per-stage parameters for the batched kernels ----
        def stack_w(ws, rows, cols):
            return jnp.stack([_pad2(w, rows, cols) for w in ws]).astype(self.dot_dtype)

        def stack_b(bs, cols):
            return jnp.stack([_pad2(b, 1, cols) for b in bs])  # biases stay f32

        ne = [self.raw_node_enc[s] for s in self.atom_types]
        nu = [self.raw_node_upd[s] for s in self.atom_types]
        cd = [self.raw_center_dec[s] for s in self.atom_types]
        ee = [self.raw_edge_enc[k] for k in self.edge_types]
        ed = [self.raw_edge_dec[k] for k in self.edge_types]

        self.ne_w1 = stack_w([p[0] for p in ne], self.ne_kin, self.h_pad)
        self.ne_b1 = stack_b([p[1] for p in ne], self.h_pad)
        self.ne_w2 = stack_w([p[2] for p in ne], self.h_pad, self.h_pad)
        self.ne_b2 = stack_b([p[3] for p in ne], self.h_pad)

        self.nu_w1 = stack_w([p[0] for p in nu], self.nu_kin, self.h_pad)
        self.nu_b1 = stack_b([p[1] for p in nu], self.h_pad)
        self.nu_w2 = stack_w([p[2] for p in nu], self.h_pad, self.h_pad)
        self.nu_b2 = stack_b([p[3] for p in nu], self.h_pad)

        self.cd_w = stack_w([p[0] for p in cd], self.h_pad, self.cd_out)
        self.cd_b = stack_b([p[1] for p in cd], self.cd_out)

        self.ee_w1 = stack_w([p[0] for p in ee], self.ee_kin, self.h_pad)
        self.ee_b1 = stack_b([p[1] for p in ee], self.h_pad)
        self.ee_w2 = stack_w([p[2] for p in ee], self.h_pad, self.h_pad)
        self.ee_b2 = stack_b([p[3] for p in ee], self.h_pad)

        self.ed_w = stack_w([p[0] for p in ed], self.h_pad, self.ed_out)
        self.ed_b = stack_b([p[1] for p in ed], self.ed_out)

        msg_pads = [self.msg_kin] + [self.h_pad] * (message_layers - 1)
        self.msg_w = [_pad2(w, p, self.h_pad).astype(self.dot_dtype)
                      for (w, _), p in zip(self.raw_msg, msg_pads)]
        self.msg_b = [_pad2(b, 1, self.h_pad) for _, b in self.raw_msg]

        # ---- ModuleDict-style per-type callables (plain jnp/XLA; tiny-row path) ----
        self.node_encoders = {s: partial(self._jnp_mlp2, params=self.raw_node_enc[s])
                              for s in self.atom_types}
        self.node_updaters = {s: partial(self._jnp_mlp2, params=self.raw_node_upd[s])
                              for s in self.atom_types}
        self.center_decoders = {s: partial(self._jnp_linear, params=self.raw_center_dec[s])
                                for s in self.atom_types}
        self.edge_encoders = {k: partial(self._jnp_mlp2, params=self.raw_edge_enc[k])
                              for k in self.edge_types}
        self.edge_decoders = {k: partial(self._jnp_linear, params=self.raw_edge_dec[k])
                              for k in self.edge_types}

    # --------------------------------------------------- tiny-row (XLA) paths --
    def _jnp_mlp2(self, x, *, params):
        w1, b1, w2, b2 = params
        x = jnp.asarray(x, jnp.float32)
        return self._act(x @ w1 + b1) @ w2 + b2

    def _jnp_linear(self, x, *, params):
        w, b = params
        return jnp.asarray(x, jnp.float32) @ w + b

    # ------------------------------------------------------- grouped layout --
    def _group_concat(self, x_by_key, keys, kin_pad):
        """Concatenate per-type rows (each group zero-padded up to a row-tile multiple)
        and build the per-tile type-id array that scalar prefetch feeds to index_maps."""
        counts = [int(x_by_key[k].shape[0]) for k in keys]
        tn = max(8, min(_round_up(max(counts), 8), ROW_TILE))
        padded = [_round_up(c, tn) for c in counts]
        offs, acc = [], 0
        for p in padded:
            offs.append(acc)
            acc += p
        parts = []
        for k, p in zip(keys, padded):
            x = jnp.asarray(x_by_key[k], jnp.float32)
            parts.append(jnp.pad(x, ((0, p - x.shape[0]), (0, kin_pad - x.shape[1]))))
        x_all = jnp.concatenate(parts, axis=0).astype(self.dot_dtype)
        tile_type = jnp.asarray(
            [i for i, p in enumerate(padded) for _ in range(p // tn)], dtype=jnp.int32)
        return x_all, tile_type, tn, counts, offs

    # -------------------------------------------------- batched hot-path calls --
    def encode_nodes(self, x_by_sym):
        """All per-atom-type node encoders in ONE grouped pallas_call."""
        x, tid, tn, counts, offs = self._group_concat(x_by_sym, self.atom_types, self.ne_kin)
        out = _call_mlp2(x, tid, self.ne_w1, self.ne_b1, self.ne_w2, self.ne_b2,
                         tn=tn, act=self._act)
        H = self.hidden_dim
        return {s: out[offs[i]:offs[i] + counts[i], :H]
                for i, s in enumerate(self.atom_types)}

    def update_and_decode_nodes(self, x_by_sym):
        """All node updaters AND center decoders fused into ONE grouped pallas_call."""
        x, tid, tn, counts, offs = self._group_concat(x_by_sym, self.atom_types, self.nu_kin)
        h, d = _call_mlp2_dec(x, tid, self.nu_w1, self.nu_b1, self.nu_w2, self.nu_b2,
                              self.cd_w, self.cd_b, tn=tn, act=self._act)
        H = self.hidden_dim
        upd = {s: h[offs[i]:offs[i] + counts[i], :H]
               for i, s in enumerate(self.atom_types)}
        dec = {s: d[offs[i]:offs[i] + counts[i], :self.center_sizes[s]]
               for i, s in enumerate(self.atom_types)}
        return upd, dec

    def encode_and_decode_edges(self, x_by_key):
        """All edge encoders AND edge decoders fused into ONE grouped pallas_call."""
        x, tid, tn, counts, offs = self._group_concat(x_by_key, self.edge_types, self.ee_kin)
        h, d = _call_mlp2_dec(x, tid, self.ee_w1, self.ee_b1, self.ee_w2, self.ee_b2,
                              self.ed_w, self.ed_b, tn=tn, act=self._act)
        H = self.hidden_dim
        enc = {k: h[offs[i]:offs[i] + counts[i], :H]
               for i, k in enumerate(self.edge_types)}
        dec = {k: d[offs[i]:offs[i] + counts[i], :self.edge_sizes[k]]
               for i, k in enumerate(self.edge_types)}
        return enc, dec

    def message_net(self, x):
        """Whole MessageNet in ONE pallas_call (all weights VMEM-resident, chained)."""
        n, fin = x.shape
        n8 = _round_up(max(n, 1), 8)
        tn = max(8, min(n8, ROW_TILE))
        n_pad = _round_up(n8, tn)
        xp = jnp.pad(jnp.asarray(x, jnp.float32),
                     ((0, n_pad - n), (0, self.msg_kin - fin))).astype(self.dot_dtype)
        out = _call_chain(xp, self.msg_w, self.msg_b, tn=tn, act=self._act)
        return out[:n, :self.hidden_dim]

    @staticmethod
    def make_all_pair_keys(atom_types):
        pairs = itertools.combinations_with_replacement(sorted(atom_types), 2)
        return [f"{a}_{b}" for a, b in pairs]


# --------------------------------------------------------------------- main --

if __name__ == "__main__":
    atom_types = ["C", "H", "O"]
    edge_types = EncoderDecoderFactoryPallas.make_all_pair_keys(atom_types)
    hidden_dim = 32
    center_sizes = {"C": 10, "H": 3, "O": 6}
    edge_sizes = {"C_C": 16, "C_H": 8, "C_O": 12, "H_H": 4, "H_O": 6, "O_O": 9}

    factory = EncoderDecoderFactoryPallas(
        atom_types, edge_types, hidden_dim, center_sizes, edge_sizes,
        message_layers=3, message_dropout=0.1, seed=0)

    key = jax.random.PRNGKey(0)
    H = hidden_dim
    # Skewed per-type counts exercise the grouped/ragged layout.
    node_counts = {"C": 9, "H": 14, "O": 6}
    edge_counts = {"C_C": 5, "C_H": 11, "C_O": 4, "H_H": 7, "H_O": 3, "O_O": 8}

    x_center, x_upd, x_edge = {}, {}, {}
    for sym in atom_types:
        key, k1, k2 = jax.random.split(key, 3)
        x_center[sym] = jax.random.normal(k1, (node_counts[sym], center_sizes[sym]),
                                          jnp.float32)
        x_upd[sym] = jax.random.normal(k2, (node_counts[sym], 2 * H), jnp.float32)
    for ek in edge_types:
        key, k1 = jax.random.split(key)
        x_edge[ek] = jax.random.normal(k1, (edge_counts[ek], edge_sizes[ek] + 1),
                                       jnp.float32)
    key, k1 = jax.random.split(key)
    msg_in = jax.random.normal(k1, (10, 3 * H), jnp.float32)

    # Batched hot path: 4 pallas_calls cover all 21 sub-modules.
    h_enc = factory.encode_nodes(x_center)
    h_upd, c_dec = factory.update_and_decode_nodes(x_upd)
    e_enc, e_dec = factory.encode_and_decode_edges(x_edge)
    msg = factory.message_net(msg_in)
    jax.block_until_ready((h_enc, h_upd, c_dec, e_enc, e_dec, msg))

    # ---- correctness: pure-JAX references on the raw (unpadded) parameters ----
    # Tolerance accommodates possible MXU-precision differences (bf16-pass defaults)
    # between the XLA reference dots and the in-kernel dots.
    TOL = dict(atol=1e-2, rtol=1e-2)

    def ref_mlp2(x, p):
        w1, b1, w2, b2 = p
        return _gelu_exact(x @ w1 + b1) @ w2 + b2

    def ref_lin(x, p):
        w, b = p
        return x @ w + b

    for sym in atom_types:
        assert jnp.allclose(h_enc[sym], ref_mlp2(x_center[sym], factory.raw_node_enc[sym]),
                            **TOL)
        ref_h = ref_mlp2(x_upd[sym], factory.raw_node_upd[sym])
        assert jnp.allclose(h_upd[sym], ref_h, **TOL)
        assert jnp.allclose(c_dec[sym], ref_lin(ref_h, factory.raw_center_dec[sym]), **TOL)

    for ek in edge_types:
        ref_e = ref_mlp2(x_edge[ek], factory.raw_edge_enc[ek])
        assert jnp.allclose(e_enc[ek], ref_e, **TOL)
        assert jnp.allclose(e_dec[ek], ref_lin(ref_e, factory.raw_edge_dec[ek]), **TOL)

    ref_m = msg_in
    for i, (w, b) in enumerate(factory.raw_msg):
        ref_m = ref_m @ w + b
        if i < len(factory.raw_msg) - 1:
            ref_m = _gelu_exact(ref_m)
    assert jnp.allclose(msg, ref_m, **TOL)

    # ---- ModuleDict-style API (tiny per-type calls run in plain jnp/XLA) ----
    sym0, ek0 = atom_types[0], edge_types[0]
    assert jnp.allclose(factory.node_encoders[sym0](x_center[sym0]), h_enc[sym0], **TOL)
    assert jnp.allclose(factory.node_updaters[sym0](x_upd[sym0]), h_upd[sym0], **TOL)
    assert jnp.allclose(factory.center_decoders[sym0](h_upd[sym0]), c_dec[sym0], **TOL)
    assert jnp.allclose(factory.edge_encoders[ek0](x_edge[ek0]), e_enc[ek0], **TOL)
    assert jnp.allclose(factory.edge_decoders[ek0](e_enc[ek0]), e_dec[ek0], **TOL)

    print("KERNEL_OK")
</pallas_src>

<mosaic_0001>
module attributes {stable_mosaic.version = 11 : i64} {
  func.func @kernel(%arg0: i32, %arg1: memref<3xi32, #tpu.memory_space<smem>>, %arg2: memref<16x128xf32, #tpu.memory_space<vmem>>, %arg3: memref<1x128x128xf32, #tpu.memory_space<vmem>>, %arg4: memref<1x1x128xf32, #tpu.memory_space<vmem>>, %arg5: memref<1x128x128xf32, #tpu.memory_space<vmem>>, %arg6: memref<1x1x128xf32, #tpu.memory_space<vmem>>, %arg7: memref<16x128xf32, #tpu.memory_space<vmem>>) attributes {dimension_semantics = [#tpu.dimension_semantics<parallel>], iteration_bounds = array<i64: 3>, scalar_prefetch = 1 : i64, scratch_operands = 0 : i64, tpu.core_type = #tpu.core_type<tc>, window_params = [{transform_indices = @transform_0, window_bounds = array<i64: 16, 128>}, {transform_indices = @transform_1, window_bounds = array<i64: 1, 128, 128>}, {transform_indices = @transform_2, window_bounds = array<i64: 1, 1, 128>}, {transform_indices = @transform_3, window_bounds = array<i64: 1, 128, 128>}, {transform_indices = @transform_4, window_bounds = array<i64: 1, 1, 128>}, {transform_indices = @transform_5, window_bounds = array<i64: 16, 128>}]} {
    %c0 = arith.constant 0 : index
    %c0_0 = arith.constant 0 : index
    %0 = vector.load %arg2[%c0, %c0_0] : memref<16x128xf32, #tpu.memory_space<vmem>>, vector<16x128xf32>
    %c0_1 = arith.constant 0 : index
    %c0_2 = arith.constant 0 : index
    %c0_3 = arith.constant 0 : index
    %1 = vector.load %arg3[%c0_1, %c0_2, %c0_3] : memref<1x128x128xf32, #tpu.memory_space<vmem>>, vector<1x128x128xf32>
    %2 = vector.shape_cast %1 : vector<1x128x128xf32> to vector<128x128xf32>
    %cst = arith.constant dense<0.000000e+00> : vector<16x128xf32>
    %3 = tpu.matmul %0, %2, %cst {dimension_numbers = #tpu.dot_dimension_numbers<[1], [0], [0], [1], [0, 0, 1, 1], [], []>} : vector<16x128xf32>, vector<128x128xf32>, vector<16x128xf32> -> vector<16x128xf32>
    %c0_4 = arith.constant 0 : index
    %c0_5 = arith.constant 0 : index
    %c0_6 = arith.constant 0 : index
    %4 = vector.load %arg4[%c0_4, %c0_5, %c0_6] : memref<1x1x128xf32, #tpu.memory_space<vmem>>, vector<1x1x128xf32>
    %5 = vector.shape_cast %4 : vector<1x1x128xf32> to vector<1x128xf32>
    %6 = vector.broadcast %5 : vector<1x128xf32> to vector<16x128xf32>
    %7 = arith.addf %3, %6 : vector<16x128xf32>
    %cst_7 = arith.constant 5.000000e-01 : f32
    %8 = vector.broadcast %cst_7 : f32 to vector<16x128xf32>
    %9 = arith.mulf %8, %7 : vector<16x128xf32>
    %cst_8 = arith.constant 0.707106769 : f32
    %10 = vector.broadcast %cst_8 : f32 to vector<16x128xf32>
    %11 = arith.mulf %7, %10 : vector<16x128xf32>
    %12 = math.erf %11 : vector<16x128xf32>
    %cst_9 = arith.constant 1.000000e+00 : f32
    %13 = vector.broadcast %cst_9 : f32 to vector<16x128xf32>
    %14 = arith.addf %13, %12 : vector<16x128xf32>
    %15 = arith.mulf %9, %14 : vector<16x128xf32>
    %c0_10 = arith.constant 0 : index
    %c0_11 = arith.constant 0 : index
    %c0_12 = arith.constant 0 : index
    %16 = vector.load %arg5[%c0_10, %c0_11, %c0_12] : memref<1x128x128xf32, #tpu.memory_space<vmem>>, vector<1x128x128xf32>
    %17 = vector.shape_cast %16 : vector<1x128x128xf32> to vector<128x128xf32>
    %cst_13 = arith.constant dense<0.000000e+00> : vector<16x128xf32>
    %18 = tpu.matmul %15, %17, %cst_13 {dimension_numbers = #tpu.dot_dimension_numbers<[1], [0], [0], [1], [0, 0, 1, 1], [], []>} : vector<16x128xf32>, vector<128x128xf32>, vector<16x128xf32> -> vector<16x128xf32>
    %c0_14 = arith.constant 0 : index
    %c0_15 = arith.constant 0 : index
    %c0_16 = arith.constant 0 : index
    %19 = vector.load %arg6[%c0_14, %c0_15, %c0_16] : memref<1x1x128xf32, #tpu.memory_space<vmem>>, vector<1x1x128xf32>
    %20 = vector.shape_cast %19 : vector<1x1x128xf32> to vector<1x128xf32>
    %21 = vector.broadcast %20 : vector<1x128xf32> to vector<16x128xf32>
    %22 = arith.addf %18, %21 : vector<16x128xf32>
    %c0_17 = arith.constant 0 : index
    %c0_18 = arith.constant 0 : index
    %23 = vector.load %arg7[%c0_17, %c0_18] : memref<16x128xf32, #tpu.memory_space<vmem>>, vector<16x128xf32>
    tpu.vector_store %arg7[%c0_17, %c0_18], %22 {strides = array<i32>} : memref<16x128xf32, #tpu.memory_space<vmem>>, vector<16x128xf32>,
    return
  }
  func.func @transform_0(%arg0: i32, %arg1: memref<3xi32, #tpu.memory_space<smem>>) -> (i32, i32) {
    %c0_i32 = arith.constant 0 : i32
    %c0_i32_0 = arith.constant 0 : i32
    return %arg0, %c0_i32 : i32, i32
  }
  func.func @transform_1(%arg0: i32, %arg1: memref<3xi32, #tpu.memory_space<smem>>) -> (i32, i32, i32) {
    %0 = arith.index_cast %arg0 : i32 to index
    %1 = memref.load %arg1[%0] : memref<3xi32, #tpu.memory_space<smem>>
    %c0_i32 = arith.constant 0 : i32
    %c0_i32_0 = arith.constant 0 : i32
    %c0_i32_1 = arith.constant 0 : i32
    return %1, %c0_i32, %c0_i32_0 : i32, i32, i32
  }
  func.func @transform_2(%arg0: i32, %arg1: memref<3xi32, #tpu.memory_space<smem>>) -> (i32, i32, i32) {
    %0 = arith.index_cast %arg0 : i32 to index
    %1 = memref.load %arg1[%0] : memref<3xi32, #tpu.memory_space<smem>>
    %c0_i32 = arith.constant 0 : i32
    %c0_i32_0 = arith.constant 0 : i32
    %c0_i32_1 = arith.constant 0 : i32
    return %1, %c0_i32, %c0_i32_0 : i32, i32, i32
  }
  func.func @transform_3(%arg0: i32, %arg1: memref<3xi32, #tpu.memory_space<smem>>) -> (i32, i32, i32) {
    %0 = arith.index_cast %arg0 : i32 to index
    %1 = memref.load %arg1[%0] : memref<3xi32, #tpu.memory_space<smem>>
    %c0_i32 = arith.constant 0 : i32
    %c0_i32_0 = arith.constant 0 : i32
    %c0_i32_1 = arith.constant 0 : i32
    return %1, %c0_i32, %c0_i32_0 : i32, i32, i32
  }
  func.func @transform_4(%arg0: i32, %arg1: memref<3xi32, #tpu.memory_space<smem>>) -> (i32, i32, i32) {
    %0 = arith.index_cast %arg0 : i32 to index
    %1 = memref.load %arg1[%0] : memref<3xi32, #tpu.memory_space<smem>>
    %c0_i32 = arith.constant 0 : i32
    %c0_i32_0 = arith.constant 0 : i32
    %c0_i32_1 = arith.constant 0 : i32
    return %1, %c0_i32, %c0_i32_0 : i32, i32, i32
  }
  func.func @transform_5(%arg0: i32, %arg1: memref<3xi32, #tpu.memory_space<smem>>) -> (i32, i32) {
    %c0_i32 = arith.constant 0 : i32
    %c0_i32_0 = arith.constant 0 : i32
    return %arg0, %c0_i32 : i32, i32
  }
}

</mosaic_0001>

<llo_original>
// kernel: tpu_custom_call.1
$region0: #{tpu_custom_call.1}
  #allocation0 [shape = 'u32[]', space=smem, size = 0x4, offset = 0x4, fixed_abs, tag = 'smem constant byte address 0x4 - core index']
  #allocation1 [shape = 'u32[144,128]{1,0:T(1,128)}', space=vmem, size = 0x12000, scoped, tag = 'internal scratch']
  #allocation2 [shape = 's32[1]{0}', space=sflag, size = 0x4, scoped, tag = 'scoped memory for tpu_custom_call.1']
  #allocation3 [shape = 'u8[512]{0}', space=smem, size = 0x200, scoped, tag = 'prefetched SMEM operand 0']
  %s0 = inlined_call_operand.hbm [shape: s32[3], index: 0, kind: input, shape index: {}]
  %s1 = inlined_call_operand.hbm [shape: f32[48,128], index: 1, kind: input, shape index: {}]
  %s2 = inlined_call_operand.hbm [shape: f32[3,128,128], index: 2, kind: input, shape index: {}]
  %s3 = inlined_call_operand.vmem [shape: f32[3,1,128], index: 3, kind: input, shape index: {}]
  %s4 = inlined_call_operand.hbm [shape: f32[3,128,128], index: 4, kind: input, shape index: {}]
  %s5 = inlined_call_operand.vmem [shape: f32[3,1,128], index: 5, kind: input, shape index: {}]
  %s6 = inlined_call_operand.hbm [shape: f32[48,128], index: 6, kind: output, shape index: {}]
  %s7 = sld [smem:[#allocation0]]
  $region65: #{tpu_custom_call.1} parent=0
    _
  %s9 = ssub.s32 1, %s7
  %s10 = scalar_select 0, %s9, %s7
  %12 = dma.hbm_to_smem %s0, 16, [#allocation3], [#allocation2]
  %13 = dma.done [#allocation2], 16
  %14 = sfence
  $region1: #{tpu_custom_call.1} parent=0
    #allocation4 [shape = 'u8[16384]{0}', space=vmem, size = 0x4000, scoped, tag = 'input window, operand 1']
    #allocation5 [shape = 's32[2]{0}', space=sflag, size = 0x8, scoped, tag = 'scoped memory for tpu_custom_call.1']
    #allocation6 [shape = 's32[2]{0}', space=sflag, size = 0x8, scoped, tag = 'scoped memory for tpu_custom_call.1']
    #allocation7 [shape = 'u8[131072]{0}', space=vmem, size = 0x20000, scoped, tag = 'input window, operand 2']
    #allocation8 [shape = 's32[2]{0}', space=sflag, size = 0x8, scoped, tag = 'scoped memory for tpu_custom_call.1']
    #allocation9 [shape = 'u8[131072]{0}', space=vmem, size = 0x20000, scoped, tag = 'input window, operand 4']
    #allocation10 [shape = 'u8[16384]{0}', space=vmem, size = 0x4000, scoped, tag = 'output window, operand 0']
    %15 = vsyncpa [#allocation5], 0
    %s16 = scalar_lea.sflag [#allocation5], 1
    %17 = vsyncpa %s16, 0
    %18 = vsyncpa [#allocation8], 0
    %s19 = scalar_lea.sflag [#allocation8], 1
    %20 = vsyncpa %s19, 0
    %21 = vsyncpa [#allocation6], 0
    %s22 = scalar_lea.sflag [#allocation6], 1
    %23 = vsyncpa %s22, 0
    loop: start=0, step=1, limit=5
    $region2: #{tpu_custom_call.1} parent=1 // loop_pre_header
      _
    $region3: #{tpu_custom_call.1} parent=1 // loop_header
      %s25 = sphi 0, %s29
      %p26 = scmp.ge.s32.totalorder %s25, 5
      %s35 = sphi 0, %s37
      %s38 = sphi 0, %s35
      %s39 = sphi 0, %s38
      %s55 = sphi 0, %s39
      %s63 = sphi 0, %s65
      %s66 = sphi 0, %s63
      %s67 = sphi 0, %s66
      %s83 = sphi 0, %s67
      %s91 = sphi 0, %s93
      %s94 = sphi 0, %s91
      %s95 = sphi 0, %s94
      %s111 = sphi 0, %s95
      %s119 = sphi 0, %s121
      %s122 = sphi 0, %s119
      %s123 = sphi 0, %s122
      %s139 = sphi 0, %s123
      %s147 = sphi 0, %s149
      %s150 = sphi 0, %s147
      %s151 = sphi 0, %s150
      %s167 = sphi 0, %s151
      %s173 = sphi 0, %s175
      %s176 = sphi 0, %s173
      %s177 = sphi 0, %s176
      %s193 = sphi 0, %s177
    $region4: #{tpu_custom_call.1} parent=1 // loop_header_branch
      %28 = sbr.rel (%p26) target = $region8
    $region5: #{tpu_custom_call.1} parent=1 // loop_body
      %s30 = ssub.s32 %s25, 1
      %s31 = ssub.s32 %s25, 2
      %s32 = sadd.s32 %s25, 1
      %s33 = ssub.s32 %s25, %s32
      %p34 = scmp.eq.s32.totalorder %s33, 0
      %s36 = sadd.s32 %s35, 1
      %s37 = scalar_select %p34, %s35, %s36
      %p40 = pneg %p34
      %p41 = scmp.eq.s32.totalorder %s25, 2
      %p42 = por %p40, %p41
      %p43 = scmp.ne.s32.totalorder %s35, %s38
      %p44 = scmp.eq.s32.totalorder %s25, 0
      %p45 = por %p43, %p44
      %p46 = scmp.ne.s32.totalorder %s35, %s38
      %p47 = scmp.eq.s32.totalorder %s30, 2
      %p48 = por %p46, %p47
      %p49 = scmp.ne.s32.totalorder %s38, %s39
      %p50 = scmp.eq.s32.totalorder %s30, 0
      %p51 = por %p49, %p50
      %p52 = scmp.ne.s32.totalorder %s38, %s39
      %p53 = scmp.eq.s32.totalorder %s31, 2
      %p54 = por %p52, %p53
      %p56 = scmp.ne.s32.totalorder %s39, %s55
      %p57 = scmp.eq.s32.totalorder %s31, 0
      %p58 = por %p56, %p57
      %s59 = sld [smem:[#allocation3 + %s25]]
      %s60 = sld [smem:[#allocation3 + %s32]]
      %s61 = ssub.s32 %s59, %s60
      %p62 = scmp.eq.s32.totalorder %s61, 0
      %s64 = sadd.s32 %s63, 1
      %s65 = scalar_select %p62, %s63, %s64
      %p68 = pneg %p62
      %p69 = scmp.eq.s32.totalorder %s25, 2
      %p70 = por %p68, %p69
      %p71 = scmp.ne.s32.totalorder %s63, %s66
      %p72 = scmp.eq.s32.totalorder %s25, 0
      %p73 = por %p71, %p72
      %p74 = scmp.ne.s32.totalorder %s63, %s66
      %p75 = scmp.eq.s32.totalorder %s30, 2
      %p76 = por %p74, %p75
      %p77 = scmp.ne.s32.totalorder %s66, %s67
      %p78 = scmp.eq.s32.totalorder %s30, 0
      %p79 = por %p77, %p78
      %p80 = scmp.ne.s32.totalorder %s66, %s67
      %p81 = scmp.eq.s32.totalorder %s31, 2
      %p82 = por %p80, %p81
      %p84 = scmp.ne.s32.totalorder %s67, %s83
      %p85 = scmp.eq.s32.totalorder %s31, 0
      %p86 = por %p84, %p85
      %s87 = sld [smem:[#allocation3 + %s25]]
      %s88 = sld [smem:[#allocation3 + %s32]]
      %s89 = ssub.s32 %s87, %s88
      %p90 = scmp.eq.s32.totalorder %s89, 0
      %s92 = sadd.s32 %s91, 1
      %s93 = scalar_select %p90, %s91, %s92
      %p96 = pneg %p90
      %p97 = scmp.eq.s32.totalorder %s25, 2
      %p98 = por %p96, %p97
      %p99 = scmp.ne.s32.totalorder %s91, %s94
      %p100 = scmp.eq.s32.totalorder %s25, 0
      %p101 = por %p99, %p100
      %p102 = scmp.ne.s32.totalorder %s91, %s94
      %p103 = scmp.eq.s32.totalorder %s30, 2
      %p104 = por %p102, %p103
      %p105 = scmp.ne.s32.totalorder %s94, %s95
      %p106 = scmp.eq.s32.totalorder %s30, 0
      %p107 = por %p105, %p106
      %p108 = scmp.ne.s32.totalorder %s94, %s95
      %p109 = scmp.eq.s32.totalorder %s31, 2
      %p110 = por %p108, %p109
      %p112 = scmp.ne.s32.totalorder %s95, %s111
      %p113 = scmp.eq.s32.totalorder %s31, 0
      %p114 = por %p112, %p113
      %s115 = sld [smem:[#allocation3 + %s25]]
      %s116 = sld [smem:[#allocation3 + %s32]]
      %s117 = ssub.s32 %s115, %s116
      %p118 = scmp.eq.s32.totalorder %s117, 0
      %s120 = sadd.s32 %s119, 1
      %s121 = scalar_select %p118, %s119, %s120
      %p124 = pneg %p118
      %p125 = scmp.eq.s32.totalorder %s25, 2
      %p126 = por %p124, %p125
      %p127 = scmp.ne.s32.totalorder %s119, %s122
      %p128 = scmp.eq.s32.totalorder %s25, 0
      %p129 = por %p127, %p128
      %p130 = scmp.ne.s32.totalorder %s119, %s122
      %p131 = scmp.eq.s32.totalorder %s30, 2
      %p132 = por %p130, %p131
      %p133 = scmp.ne.s32.totalorder %s122, %s123
      %p134 = scmp.eq.s32.totalorder %s30, 0
      %p135 = por %p133, %p134
      %p136 = scmp.ne.s32.totalorder %s122, %s123
      %p137 = scmp.eq.s32.totalorder %s31, 2
      %p138 = por %p136, %p137
      %p140 = scmp.ne.s32.totalorder %s123, %s139
      %p141 = scmp.eq.s32.totalorder %s31, 0
      %p142 = por %p140, %p141
      %s143 = sld [smem:[#allocation3 + %s25]]
      %s144 = sld [smem:[#allocation3 + %s32]]
      %s145 = ssub.s32 %s143, %s144
      %p146 = scmp.eq.s32.totalorder %s145, 0
      %s148 = sadd.s32 %s147, 1
      %s149 = scalar_select %p146, %s147, %s148
      %p152 = pneg %p146
      %p153 = scmp.eq.s32.totalorder %s25, 2
      %p154 = por %p152, %p153
      %p155 = scmp.ne.s32.totalorder %s147, %s150
      %p156 = scmp.eq.s32.totalorder %s25, 0
      %p157 = por %p155, %p156
      %p158 = scmp.ne.s32.totalorder %s147, %s150
      %p159 = scmp.eq.s32.totalorder %s30, 2
      %p160 = por %p158, %p159
      %p161 = scmp.ne.s32.totalorder %s150, %s151
      %p162 = scmp.eq.s32.totalorder %s30, 0
      %p163 = por %p161, %p162
      %p164 = scmp.ne.s32.totalorder %s150, %s151
      %p165 = scmp.eq.s32.totalorder %s31, 2
      %p166 = por %p164, %p165
      %p168 = scmp.ne.s32.totalorder %s151, %s167
      %p169 = scmp.eq.s32.totalorder %s31, 0
      %p170 = por %p168, %p169
      %s171 = ssub.s32 %s25, %s32
      %p172 = scmp.eq.s32.totalorder %s171, 0
      %s174 = sadd.s32 %s173, 1
      %s175 = scalar_select %p172, %s173, %s174
      %p178 = pneg %p172
      %p179 = scmp.eq.s32.totalorder %s25, 2
      %p180 = por %p178, %p179
      %p181 = scmp.ne.s32.totalorder %s173, %s176
      %p182 = scmp.eq.s32.totalorder %s25, 0
      %p183 = por %p181, %p182
      %p184 = scmp.ne.s32.totalorder %s173, %s176
      %p185 = scmp.eq.s32.totalorder %s30, 2
      %p186 = por %p184, %p185
      %p187 = scmp.ne.s32.totalorder %s176, %s177
      %p188 = scmp.eq.s32.totalorder %s30, 0
      %p189 = por %p187, %p188
      %p190 = scmp.ne.s32.totalorder %s176, %s177
      %p191 = scmp.eq.s32.totalorder %s31, 2
      %p192 = por %p190, %p191
      %p194 = scmp.ne.s32.totalorder %s177, %s193
      %p195 = scmp.eq.s32.totalorder %s31, 0
      %p196 = por %p194, %p195
      %p197 = scmp.le.s32.totalorder 1, %s25
      %p198 = scmp.lt.s32.totalorder %s25, 4
      %p199 = pnand %p197, %p198
      %p200 = pneg %p199
      // Predicated region
      $region9: #{tpu_custom_call.1} parent=5 // pred_check
        _
      $region10: #{tpu_custom_call.1} parent=5 // pred_check_branch
        %202 = sbr.rel (%p199) target = $region12
      $region11: #{tpu_custom_call.1} parent=5 // pred_region
        %s203 = ssub.s32 %s25, 1
      $region12: #{tpu_custom_call.1} parent=5 // pred_fallthru
        _
      %p204 = scmp.lt.s32.totalorder %s25, 3
      // Predicated region
      $region13: #{tpu_custom_call.1} parent=5 // pred_check
        %p205 = pneg %p204
      $region14: #{tpu_custom_call.1} parent=5 // pred_check_branch
        %207 = sbr.rel (%p205) target = $region16
      $region15: #{tpu_custom_call.1} parent=5 // pred_region
        // Predicated region
        $region17: #{tpu_custom_call.1} parent=15 // pred_check
          %p208 = pneg %p45
        $region18: #{tpu_custom_call.1} parent=15 // pred_check_branch
          %210 = sbr.rel (%p208) target = $region20
        $region19: #{tpu_custom_call.1} parent=15 // pred_region
          %s211 = sand.u32 %s35, 1
          %s212 = scalar_lea.sflag [#allocation5], %s211
          %s213 = sand.u32 %s35, 1
          %s214 = smul.addr %s213, 16
          %s215 = scalar_lea.vmem [#allocation4], %s214
          %s216 = smul.u32 2, %s25
          %s218 = ssub.s32 256, 256
          %219 = vsyncadd %s212, %s218
          %s220 = smul.addr %s216, 128
          %s221 = scalar_lea.hbm %s1, %s220
          %s222 = sshll.u32 %s215, 4
          %s223 = int_to_ptr.vmem [resolvable:$true] %s222
          %228 = dma.hbm_to_vmem [thread:$0]  %s221, 256, %s223, %s212, 128, 128, 8
        $region20: #{tpu_custom_call.1} parent=15 // pred_fallthru
          _
        // Predicated region
        $region21: #{tpu_custom_call.1} parent=15 // pred_check
          %p229 = pneg %p73
        $region22: #{tpu_custom_call.1} parent=15 // pred_check_branch
          %231 = sbr.rel (%p229) target = $region24
        $region23: #{tpu_custom_call.1} parent=15 // pred_region
          %s232 = sand.u32 %s25, 1
          %s233 = scalar_lea.sflag [#allocation8], %s232
          %s234 = sand.u32 %s63, 1
          %s235 = smul.addr %s234, 128
          %s236 = scalar_lea.vmem [#allocation7], %s235
          %s237 = sld [smem:[#allocation3 + %s25]]
          %s239 = ssub.s32 2048, 2048
          %240 = vsyncadd %s233, %s239
          %s241 = smul.addr %s237, 16
          %s242 = smul.addr %s241, 128
          %s243 = scalar_lea.hbm %s2, %s242
          %s244 = sshll.u32 %s236, 4
          %s245 = int_to_ptr.vmem [resolvable:$true] %s244
          %250 = dma.hbm_to_vmem [thread:$0]  %s243, 2048, %s245, %s233, 128, 128, 8
        $region24: #{tpu_custom_call.1} parent=15 // pred_fallthru
          _
        // Predicated region
        $region25: #{tpu_custom_call.1} parent=15 // pred_check
          %p251 = pneg %p101
        $region26: #{tpu_custom_call.1} parent=15 // pred_check_branch
          %253 = sbr.rel (%p251) target = $region28
        $region27: #{tpu_custom_call.1} parent=15 // pred_region
          %s254 = sld [smem:[#allocation3 + %s25]]
          %p255 = scmp.lt.s32.totalorder %s254, 2
          %s256 = scalar_select %p255, %s254, 2
          %s257 = scalar_lea.vmem %s3, %s256
          %s258 = sld [smem:[#allocation3 + %s25]]
        $region28: #{tpu_custom_call.1} parent=15 // pred_fallthru
          _
        // Predicated region
        $region29: #{tpu_custom_call.1} parent=15 // pred_check
          %p259 = pneg %p129
        $region30: #{tpu_custom_call.1} parent=15 // pred_check_branch
          %261 = sbr.rel (%p259) target = $region32
        $region31: #{tpu_custom_call.1} parent=15 // pred_region
          %s262 = sand.u32 %s25, 1
          %s263 = scalar_lea.sflag [#allocation8], %s262
          %s264 = sand.u32 %s119, 1
          %s265 = smul.addr %s264, 128
          %s266 = scalar_lea.vmem [#allocation9], %s265
          %s267 = sld [smem:[#allocation3 + %s25]]
          %s269 = ssub.s32 2048, 2048
          %270 = vsyncadd %s263, %s269
          %s271 = smul.addr %s267, 16
          %s272 = smul.addr %s271, 128
          %s273 = scalar_lea.hbm %s4, %s272
          %s274 = sshll.u32 %s266, 4
          %s275 = int_to_ptr.vmem [resolvable:$true] %s274
          %280 = dma.hbm_to_vmem [thread:$0]  %s273, 2048, %s275, %s263, 128, 128, 8
        $region32: #{tpu_custom_call.1} parent=15 // pred_fallthru
          _
        // Predicated region
        $region33: #{tpu_custom_call.1} parent=15 // pred_check
          %p281 = pneg %p157
        $region34: #{tpu_custom_call.1} parent=15 // pred_check_branch
          %283 = sbr.rel (%p281) target = $region36
        $region35: #{tpu_custom_call.1} parent=15 // pred_region
          %s284 = sld [smem:[#allocation3 + %s25]]
          %p285 = scmp.lt.s32.totalorder %s284, 2
          %s286 = scalar_select %p285, %s284, 2
          %s287 = scalar_lea.vmem %s5, %s286
          %s288 = sld [smem:[#allocation3 + %s25]]
        $region36: #{tpu_custom_call.1} parent=15 // pred_fallthru
          _
      $region16: #{tpu_custom_call.1} parent=5 // pred_fallthru
        _
      %p289 = scmp.le.s32.totalorder 1, %s25
      %p290 = scmp.lt.s32.totalorder %s25, 4
      %p291 = pnand %p289, %p290
      %p292 = pneg %p291
      // Predicated region
      $region37: #{tpu_custom_call.1} parent=5 // pred_check
        _
      $region38: #{tpu_custom_call.1} parent=5 // pred_check_branch
        %294 = sbr.rel (%p291) target = $region40
      $region39: #{tpu_custom_call.1} parent=5 // pred_region
        %s295 = ssub.s32 %s25, 1
        %s296 = sand.u32 %s38, 1
        %s297 = scalar_lea.sflag [#allocation5], %s296
        %s298 = sand.u32 %s38, 1
        %s299 = smul.addr %s298, 16
        %s300 = scalar_lea.vmem [#allocation4], %s299
        // Predicated region
        $region41: #{tpu_custom_call.1} parent=39 // pred_check
          %p301 = pneg %p51
        $region42: #{tpu_custom_call.1} parent=39 // pred_check_branch
          %303 = sbr.rel (%p301) target = $region44
        $region43: #{tpu_custom_call.1} parent=39 // pred_region
          %304 = dma.done %s297, 256
        $region44: #{tpu_custom_call.1} parent=39 // pred_fallthru
          _
        %s305 = sand.u32 %s30, 1
        %s306 = scalar_lea.sflag [#allocation8], %s305
        %s307 = sand.u32 %s66, 1
        %s308 = smul.addr %s307, 128
        %s309 = scalar_lea.vmem [#allocation7], %s308
        // Predicated region
        $region45: #{tpu_custom_call.1} parent=39 // pred_check
          %p310 = pneg %p79
        $region46: #{tpu_custom_call.1} parent=39 // pred_check_branch
          %312 = sbr.rel (%p310) target = $region48
        $region47: #{tpu_custom_call.1} parent=39 // pred_region
          %313 = dma.done %s306, 2048
        $region48: #{tpu_custom_call.1} parent=39 // pred_fallthru
          _
        %s314 = sand.u32 %s30, 1
        %s315 = scalar_lea.sflag [#allocation8], %s314
        %s316 = sand.u32 %s122, 1
        %s317 = smul.addr %s316, 128
        %s318 = scalar_lea.vmem [#allocation9], %s317
        // Predicated region
        $region49: #{tpu_custom_call.1} parent=39 // pred_check
          %p319 = pneg %p135
        $region50: #{tpu_custom_call.1} parent=39 // pred_check_branch
          %321 = sbr.rel (%p319) target = $region52
        $region51: #{tpu_custom_call.1} parent=39 // pred_region
          %322 = dma.done %s315, 2048
        $region52: #{tpu_custom_call.1} parent=39 // pred_fallthru
          _
        %s323 = sand.u32 %s38, 1
        %s324 = scalar_lea.sflag [#allocation5], %s323
        %s325 = sand.u32 %s38, 1
        %s326 = smul.addr %s325, 16
        %s327 = scalar_lea.vmem [#allocation4], %s326
        %p328 = pneg %p51
        %p329 = pneg %p48
        %s330 = sand.u32 %s30, 1
        %s331 = scalar_lea.sflag [#allocation8], %s330
        %s332 = sand.u32 %s66, 1
        %s333 = smul.addr %s332, 128
        %s334 = scalar_lea.vmem [#allocation7], %s333
        %p335 = pneg %p79
        %p336 = pneg %p76
        %s337 = sld [smem:[#allocation3 + %s30]]
        %p338 = scmp.lt.s32.totalorder %s337, 2
        %s339 = scalar_select %p338, %s337, 2
        %s340 = scalar_lea.vmem %s3, %s339
        %p341 = pneg %p107
        %p342 = pneg %p104
        %s343 = sand.u32 %s30, 1
        %s344 = scalar_lea.sflag [#allocation8], %s343
        %s345 = sand.u32 %s122, 1
        %s346 = smul.addr %s345, 128
        %s347 = scalar_lea.vmem [#allocation9], %s346
        %p348 = pneg %p135
        %p349 = pneg %p132
        %s350 = sld [smem:[#allocation3 + %s30]]
        %p351 = scmp.lt.s32.totalorder %s350, 2
        %s352 = scalar_select %p351, %s350, 2
        %s353 = scalar_lea.vmem %s5, %s352
        %p354 = pneg %p163
        %p355 = pneg %p160
        %p356 = pneg %p189
        %p357 = pneg %p186
        %s358 = sand.u32 %s176, 1
        %s359 = scalar_lea.sflag [#allocation6], %s358
        %s360 = sand.u32 %s176, 1
        %s361 = smul.addr %s360, 16
        %s362 = scalar_lea.vmem [#allocation10], %s361
        %s363 = smul.u32 2, %s30
        %s364 = sld [smem:[#allocation3 + %s30]]
        %s365 = sld [smem:[#allocation3 + %s30]]
        %p366 = scmp.lt.s32.totalorder %s365, 2
        %s367 = scalar_select %p366, %s365, 2
        %s368 = scalar_lea.vmem %s3, %s367
        %s369 = sld [smem:[#allocation3 + %s30]]
        %s370 = sld [smem:[#allocation3 + %s30]]
        %s371 = sld [smem:[#allocation3 + %s30]]
        %p372 = scmp.lt.s32.totalorder %s371, 2
        %s373 = scalar_select %p372, %s371, 2
        %s374 = scalar_lea.vmem %s5, %s373
        %s375 = sld [smem:[#allocation3 + %s30]]
        %s376 = smul.u32 2, %s30
        %v377 = vld [vmem:[%s300] sm:$0xff]
        %v378 = vld [vmem:[%s300 + $0x8] sm:$0xff]
        %v379 = vld [vmem:[%s309] sm:$0xff]
        %v380 = vld [vmem:[%s309 + $0x8] sm:$0xff]
        %v381 = vld [vmem:[%s309 + $0x10] sm:$0xff]
        %v382 = vld [vmem:[%s309 + $0x18] sm:$0xff]
        %v383 = vld [vmem:[%s309 + $0x20] sm:$0xff]
        %v384 = vld [vmem:[%s309 + $0x28] sm:$0xff]
        %v385 = vld [vmem:[%s309 + $0x30] sm:$0xff]
        %v386 = vld [vmem:[%s309 + $0x38] sm:$0xff]
        %v387 = vld [vmem:[%s309 + $0x40] sm:$0xff]
        %v388 = vld [vmem:[%s309 + $0x48] sm:$0xff]
        %v389 = vld [vmem:[%s309 + $0x50] sm:$0xff]
        %v390 = vld [vmem:[%s309 + $0x58] sm:$0xff]
        %v391 = vld [vmem:[%s309 + $0x60] sm:$0xff]
        %v392 = vld [vmem:[%s309 + $0x68] sm:$0xff]
        %v393 = vld [vmem:[%s309 + $0x70] sm:$0xff]
        %v394 = vld [vmem:[%s309 + $0x78] sm:$0xff]
        %v395 = vld [vmem:[%s368] sm:$0x1]
        %v397 = vlaneseq
        %v398 = vshrl.u32 %v397, 7
        %v399 = vsub.s32 0, %v398
        %v400 = vrot.slane %v395, %v399
        %402 = vmatprep.subr.mxu0 0.0
        %403 = vmatpush1.msra.mxu0 %v379
        %404 = vmatprep.subr.mxu0 0.0
        %405 = vmatpush1.msra.mxu0 %v380
        %406 = vmatprep.subr.mxu0 0.0
        %407 = vmatpush1.msra.mxu0 %v381
        %408 = vmatprep.subr.mxu0 0.0
        %409 = vmatpush1.msra.mxu0 %v382
        %410 = vmatprep.subr.mxu0 0.0
        %411 = vmatpush1.msra.mxu0 %v383
        %412 = vmatprep.subr.mxu0 0.0
        %413 = vmatpush1.msra.mxu0 %v384
        %414 = vmatprep.subr.mxu0 0.0
        %415 = vmatpush1.msra.mxu0 %v385
        %416 = vmatprep.subr.mxu0 0.0
        %417 = vmatpush1.msra.mxu0 %v386
        %418 = vmatprep.subr.mxu0 0.0
        %419 = vmatpush1.msra.mxu0 %v387
        %420 = vmatprep.subr.mxu0 0.0
        %421 = vmatpush1.msra.mxu0 %v388
        %422 = vmatprep.subr.mxu0 0.0
        %423 = vmatpush1.msra.mxu0 %v389
        %424 = vmatprep.subr.mxu0 0.0
        %425 = vmatpush1.msra.mxu0 %v390
        %426 = vmatprep.subr.mxu0 0.0
        %427 = vmatpush1.msra.mxu0 %v391
        %428 = vmatprep.subr.mxu0 0.0
        %429 = vmatpush1.msra.mxu0 %v392
        %430 = vmatprep.subr.mxu0 0.0
        %431 = vmatpush1.msra.mxu0 %v393
        %432 = vmatprep.subr.mxu0 0.0
        %433 = vmatpush1.msra.mxu0 %v394
        %434 = vmatprep.subr.mxu0 0.0
        %435 = vmatpush1.msra.mxu0 0.0
        %436 = vmatprep.subr.mxu0 0.0
        %437 = vmatpush1.msra.mxu0 0.0
        %438 = vmatprep.subr.mxu0 0.0
        %439 = vmatpush1.msra.mxu0 0.0
        %440 = vmatprep.subr.mxu0 0.0
        %441 = vmatpush1.msra.mxu0 0.0
        %442 = vmatprep.subr.mxu0 0.0
        %443 = vmatpush1.msra.mxu0 0.0
        %444 = vmatprep.subr.mxu0 0.0
        %445 = vmatpush1.msra.mxu0 0.0
        %446 = vmatprep.subr.mxu0 0.0
        %447 = vmatpush1.msra.mxu0 0.0
        %448 = vmatprep.subr.mxu0 0.0
        %449 = vmatpush1.msra.mxu0 0.0
        %450 = vmatprep.subr.mxu0 0.0
        %451 = vmatpush1.msra.mxu0 0.0
        %452 = vmatprep.subr.mxu0 0.0
        %453 = vmatpush1.msra.mxu0 0.0
        %454 = vmatprep.subr.mxu0 0.0
        %455 = vmatpush1.msra.mxu0 0.0
        %456 = vmatprep.subr.mxu0 0.0
        %457 = vmatpush1.msra.mxu0 0.0
        %458 = vmatprep.subr.mxu0 0.0
        %459 = vmatpush1.msra.mxu0 0.0
        %460 = vmatprep.subr.mxu0 0.0
        %461 = vmatpush1.msra.mxu0 0.0
        %462 = vmatprep.subr.mxu0 0.0
        %463 = vmatpush1.msra.mxu0 0.0
        %464 = vmatprep.subr.mxu0 0.0
        %465 = vmatpush1.msra.mxu0 0.0
        %466 = vmatprep.mubr.f32.mxu0 0.0
        %467 = vmatmul.mubr.f32.gmra.mrb[0].mxu0 %v377
        %v468 = vpop.f32.mrb[0].mxu0
        %v469 = vadd.f32 %v400, %v468
        %v470 = vpop.f32.mrb[0].mxu0
        %471 = vmatprep.mubr.f32.mxu0 0.0
        %472 = vmatmul.mubr.f32.gmra.mrb[0].mxu0 %v378
        %v473 = vpop.f32.mrb[0].mxu0
        %v474 = vadd.f32 %v400, %v473
        %v475 = vpop.f32.mrb[0].mxu0
        %476 = vdwg.mxu0
        %v477 = vmul.f32 %v469, 0.5
        %v478 = vmul.f32 %v474, 0.5
        %v479 = vmul.f32 %v469, 0.70710677
        %v480 = vmul.f32 %v474, 0.70710677
        %v481 = verf.f32.pop %v479
        %v482 = verf.f32.pop %v480
        %v483 = vadd.f32 %v481, 1.0
        %v484 = vadd.f32 %v482, 1.0
        %v485 = vmul.f32 %v477, %v483
        %v486 = vmul.f32 %v478, %v484
        %v487 = vld [vmem:[%s318] sm:$0xff]
        %v488 = vld [vmem:[%s318 + $0x8] sm:$0xff]
        %v489 = vld [vmem:[%s318 + $0x10] sm:$0xff]
        %v490 = vld [vmem:[%s318 + $0x18] sm:$0xff]
        %v491 = vld [vmem:[%s318 + $0x20] sm:$0xff]
        %v492 = vld [vmem:[%s318 + $0x28] sm:$0xff]
        %v493 = vld [vmem:[%s318 + $0x30] sm:$0xff]
        %v494 = vld [vmem:[%s318 + $0x38] sm:$0xff]
        %v495 = vld [vmem:[%s318 + $0x40] sm:$0xff]
        %v496 = vld [vmem:[%s318 + $0x48] sm:$0xff]
        %v497 = vld [vmem:[%s318 + $0x50] sm:$0xff]
        %v498 = vld [vmem:[%s318 + $0x58] sm:$0xff]
        %v499 = vld [vmem:[%s318 + $0x60] sm:$0xff]
        %v500 = vld [vmem:[%s318 + $0x68] sm:$0xff]
        %v501 = vld [vmem:[%s318 + $0x70] sm:$0xff]
        %v502 = vld [vmem:[%s318 + $0x78] sm:$0xff]
        %v503 = vld [vmem:[%s374] sm:$0x1]
        %v505 = vlaneseq
        %v506 = vshrl.u32 %v505, 7
        %v507 = vsub.s32 0, %v506
        %v508 = vrot.slane %v503, %v507
        %510 = vmatprep.subr.mxu0 0.0
        %511 = vmatpush1.msra.mxu0 %v487
        %512 = vmatprep.subr.mxu0 0.0
        %513 = vmatpush1.msra.mxu0 %v488
        %514 = vmatprep.subr.mxu0 0.0
        %515 = vmatpush1.msra.mxu0 %v489
        %516 = vmatprep.subr.mxu0 0.0
        %517 = vmatpush1.msra.mxu0 %v490
        %518 = vmatprep.subr.mxu0 0.0
        %519 = vmatpush1.msra.mxu0 %v491
        %520 = vmatprep.subr.mxu0 0.0
        %521 = vmatpush1.msra.mxu0 %v492
        %522 = vmatprep.subr.mxu0 0.0
        %523 = vmatpush1.msra.mxu0 %v493
        %524 = vmatprep.subr.mxu0 0.0
        %525 = vmatpush1.msra.mxu0 %v494
        %526 = vmatprep.subr.mxu0 0.0
        %527 = vmatpush1.msra.mxu0 %v495
        %528 = vmatprep.subr.mxu0 0.0
        %529 = vmatpush1.msra.mxu0 %v496
        %530 = vmatprep.subr.mxu0 0.0
        %531 = vmatpush1.msra.mxu0 %v497
        %532 = vmatprep.subr.mxu0 0.0
        %533 = vmatpush1.msra.mxu0 %v498
        %534 = vmatprep.subr.mxu0 0.0
        %535 = vmatpush1.msra.mxu0 %v499
        %536 = vmatprep.subr.mxu0 0.0
        %537 = vmatpush1.msra.mxu0 %v500
        %538 = vmatprep.subr.mxu0 0.0
        %539 = vmatpush1.msra.mxu0 %v501
        %540 = vmatprep.subr.mxu0 0.0
        %541 = vmatpush1.msra.mxu0 %v502
        %542 = vmatprep.subr.mxu0 0.0
        %543 = vmatpush1.msra.mxu0 0.0
        %544 = vmatprep.subr.mxu0 0.0
        %545 = vmatpush1.msra.mxu0 0.0
        %546 = vmatprep.subr.mxu0 0.0
        %547 = vmatpush1.msra.mxu0 0.0
        %548 = vmatprep.subr.mxu0 0.0
        %549 = vmatpush1.msra.mxu0 0.0
        %550 = vmatprep.subr.mxu0 0.0
        %551 = vmatpush1.msra.mxu0 0.0
        %552 = vmatprep.subr.mxu0 0.0
        %553 = vmatpush1.msra.mxu0 0.0
        %554 = vmatprep.subr.mxu0 0.0
        %555 = vmatpush1.msra.mxu0 0.0
        %556 = vmatprep.subr.mxu0 0.0
        %557 = vmatpush1.msra.mxu0 0.0
        %558 = vmatprep.subr.mxu0 0.0
        %559 = vmatpush1.msra.mxu0 0.0
        %560 = vmatprep.subr.mxu0 0.0
        %561 = vmatpush1.msra.mxu0 0.0
        %562 = vmatprep.subr.mxu0 0.0
        %563 = vmatpush1.msra.mxu0 0.0
        %564 = vmatprep.subr.mxu0 0.0
        %565 = vmatpush1.msra.mxu0 0.0
        %566 = vmatprep.subr.mxu0 0.0
        %567 = vmatpush1.msra.mxu0 0.0
        %568 = vmatprep.subr.mxu0 0.0
        %569 = vmatpush1.msra.mxu0 0.0
        %570 = vmatprep.subr.mxu0 0.0
        %571 = vmatpush1.msra.mxu0 0.0
        %572 = vmatprep.subr.mxu0 0.0
        %573 = vmatpush1.msra.mxu0 0.0
        %574 = vmatprep.mubr.f32.mxu0 0.0
        %575 = vmatmul.mubr.f32.gmra.mrb[0].mxu0 %v485
        %v576 = vpop.f32.mrb[0].mxu0
        %v577 = vadd.f32 %v508, %v576
        %v578 = vpop.f32.mrb[0].mxu0
        %579 = vmatprep.mubr.f32.mxu0 0.0
        %580 = vmatmul.mubr.f32.gmra.mrb[0].mxu0 %v486
        %v581 = vpop.f32.mrb[0].mxu0
        %v582 = vadd.f32 %v508, %v581
        %v583 = vpop.f32.mrb[0].mxu0
        %584 = vdwg.mxu0
        %585 = vst [vmem:[%s362] sm:$0xff] %v577
        %586 = vst [vmem:[%s362 + $0x8] sm:$0xff] %v582
        %s587 = sand.u32 %s176, 1
        %s588 = scalar_lea.sflag [#allocation6], %s587
        %s589 = sand.u32 %s176, 1
        %s590 = smul.addr %s589, 16
        %s591 = scalar_lea.vmem [#allocation10], %s590
        // Predicated region
        $region53: #{tpu_custom_call.1} parent=39 // pred_check
          %p592 = pneg %p186
        $region54: #{tpu_custom_call.1} parent=39 // pred_check_branch
          %594 = sbr.rel (%p592) target = $region56
        $region55: #{tpu_custom_call.1} parent=39 // pred_region
          %s595 = smul.u32 2, %s30
          %s597 = ssub.s32 256, 256
          %598 = vsyncadd %s588, %s597
          %s599 = smul.addr %s595, 128
          %s600 = scalar_lea.hbm %s6, %s599
          %s601 = sshll.u32 %s591, 4
          %s602 = int_to_ptr.vmem [resolvable:$true] %s601
          %607 = dma.vmem_to_hbm [thread:$0]  %s602, 256, %s600, %s588, 128, 128, 8
        $region56: #{tpu_custom_call.1} parent=39 // pred_fallthru
          _
      $region40: #{tpu_custom_call.1} parent=5 // pred_fallthru
        _
      %p608 = scmp.le.s32.totalorder 2, %s25
      // Predicated region
      $region57: #{tpu_custom_call.1} parent=5 // pred_check
        %p609 = pneg %p608
      $region58: #{tpu_custom_call.1} parent=5 // pred_check_branch
        %611 = sbr.rel (%p609) target = $region60
      $region59: #{tpu_custom_call.1} parent=5 // pred_region
        %s612 = ssub.s32 %s25, 2
        // Predicated region
        $region61: #{tpu_custom_call.1} parent=59 // pred_check
          %p613 = pneg %p192
        $region62: #{tpu_custom_call.1} parent=59 // pred_check_branch
          %615 = sbr.rel (%p613) target = $region64
        $region63: #{tpu_custom_call.1} parent=59 // pred_region
          %s616 = sand.u32 %s177, 1
          %s617 = scalar_lea.sflag [#allocation6], %s616
          %s618 = sand.u32 %s177, 1
          %s619 = smul.addr %s618, 16
          %s620 = scalar_lea.vmem [#allocation10], %s619
          %621 = dma.done %s617, 256
        $region64: #{tpu_custom_call.1} parent=59 // pred_fallthru
          _
      $region60: #{tpu_custom_call.1} parent=5 // pred_fallthru
        _
    $region6: #{tpu_custom_call.1} parent=1 // loop_footer
      %s29 = sadd.s32 1, %s25
    $region7: #{tpu_custom_call.1} parent=1 // loop_footer_branch
      %24 = sbr.rel target = $region3
    $region8: #{tpu_custom_call.1} parent=1 // loop_exit
      _
    %622 = vsyncpa [#allocation5], 1
    %s623 = scalar_lea.sflag [#allocation5], 1
    %624 = vsyncpa %s623, 1
    %625 = vsyncpa [#allocation8], 1
    %s626 = scalar_lea.sflag [#allocation8], 1
    %627 = vsyncpa %s626, 1
    %628 = vsyncpa [#allocation6], 1
    %s629 = scalar_lea.sflag [#allocation6], 1
    %630 = vsyncpa %s629, 1

</llo_original>
